<compile_context>
chip_gen: v5e
topology: v5e:2x2
jax: 0.10.0
libtpu: 0.0.40
codegen_flags: <defaults>
</compile_context>

<pallas_src>
import functools

import jax
import jax.numpy as jnp
from jax.experimental import pallas as pl
from jax.experimental.pallas import tpu as pltpu


# --------------------------------------------------------------------------
# Fused single-pass kernel: pool + squeeze-excite + rescale per batch chunk.
# --------------------------------------------------------------------------
def _ca_fused_kernel(x_ref, p_ref, o_ref, *, C, Cr):
    # x_ref / o_ref: (Nb, C, S) block.  p_ref: packed SE params (C+1, Cr+C).
    x = x_ref[...]
    xf = x.astype(jnp.float32)

    # Global average pool over the spatial (lane) axis -> lane-dense (Nb, C).
    pooled = jnp.mean(xf, axis=-1)

    P = p_ref[...]
    w1t = P[:C, :Cr]          # (C, Cr)   == conv1 weight, transposed
    b1 = P[C:C + 1, :Cr]      # (1, Cr)
    w2t = P[:Cr, Cr:]         # (Cr, C)   == conv2 weight, transposed
    b2 = P[Cr:Cr + 1, Cr:]    # (1, C)

    # Squeeze-excite as one batched matmul per step (not Nb degenerate dots).
    h = jnp.maximum(
        jnp.dot(pooled, w1t, preferred_element_type=jnp.float32) + b1, 0.0)
    y = jax.nn.sigmoid(
        jnp.dot(h, w2t, preferred_element_type=jnp.float32) + b2)  # (Nb, C)

    o_ref[...] = (xf * y[:, :, None]).astype(o_ref.dtype)


def _ca_fused(x_flat, packed, *, nb, vmem_limit):
    N, C, S = x_flat.shape
    Pr, Pc = packed.shape
    Cr = Pc - C
    itemsize = jnp.dtype(x_flat.dtype).itemsize

    cost = pl.CostEstimate(
        flops=int(4 * N * C * S + 4 * N * C * Cr),
        transcendentals=int(N * C),
        bytes_accessed=int(2 * N * C * S * itemsize + packed.size * 4),
    )
    return pl.pallas_call(
        functools.partial(_ca_fused_kernel, C=C, Cr=Cr),
        out_shape=jax.ShapeDtypeStruct((N, C, S), x_flat.dtype),
        grid_spec=pltpu.PrefetchScalarGridSpec(
            num_scalar_prefetch=0,
            grid=(N // nb,),
            in_specs=[
                pl.BlockSpec((nb, C, S), lambda n: (n, 0, 0)),   # x chunk
                pl.BlockSpec((Pr, Pc), lambda n: (0, 0)),        # packed params
            ],
            out_specs=pl.BlockSpec((nb, C, S), lambda n: (n, 0, 0)),
        ),
        compiler_params=pltpu.CompilerParams(
            dimension_semantics=("parallel",),
            vmem_limit_bytes=int(vmem_limit)),
        cost_estimate=cost,
    )(x_flat, packed)


# --------------------------------------------------------------------------
# S-tiled two-pass fallback (samples too large for VMEM).
# --------------------------------------------------------------------------
def _pool_kernel(x_ref, sum_ref, *, total_s, ts):
    s = pl.program_id(1)

    @pl.when(s == 0)
    def _():
        sum_ref[...] = jnp.zeros_like(sum_ref)

    x = x_ref[0].astype(jnp.float32)                  # (C, ts)
    if total_s % ts != 0:                             # mask ragged last tile
        lane = jax.lax.broadcasted_iota(jnp.int32, x.shape, 1)
        x = jnp.where(s * ts + lane < total_s, x, 0.0)
    sum_ref[0] += jnp.sum(x, axis=-1, keepdims=True)  # (C, 1)


def _rescale_kernel(x_ref, y_ref, o_ref):
    xf = x_ref[...].astype(jnp.float32)
    o_ref[...] = (xf * y_ref[...]).astype(o_ref.dtype)


def _ca_tiled(x_flat, w1, b1, w2, b2, *, ts, vmem_limit):
    N, C, S = x_flat.shape
    ns = -(-S // ts)
    itemsize = jnp.dtype(x_flat.dtype).itemsize

    # Pass 1: per-channel sums (resident accumulator across the S grid axis).
    sums = pl.pallas_call(
        functools.partial(_pool_kernel, total_s=S, ts=ts),
        out_shape=jax.ShapeDtypeStruct((N, C, 1), jnp.float32),
        grid_spec=pltpu.PrefetchScalarGridSpec(
            num_scalar_prefetch=0,
            grid=(N, ns),
            in_specs=[pl.BlockSpec((1, C, ts), lambda n, s: (n, 0, s))],
            out_specs=pl.BlockSpec((1, C, 1), lambda n, s: (n, 0, 0)),
        ),
        compiler_params=pltpu.CompilerParams(
            dimension_semantics=("parallel", "arbitrary"),
            vmem_limit_bytes=int(vmem_limit)),
        cost_estimate=pl.CostEstimate(
            flops=int(N * C * S), transcendentals=0,
            bytes_accessed=int(N * C * S * itemsize + N * C * 4)),
    )(x_flat)

    # Tiny squeeze-excite MLP on (N, C) in plain JAX (hoisted off the kernel).
    mean = sums[:, :, 0] * (1.0 / S)
    h = jnp.maximum(mean @ w1.astype(jnp.float32).T + b1.astype(jnp.float32), 0.0)
    scale = jax.nn.sigmoid(h @ w2.astype(jnp.float32).T + b2.astype(jnp.float32))
    scale = scale[:, :, None]                                    # (N, C, 1) f32

    # Pass 2: rescale (re-reads x tile by tile).
    return pl.pallas_call(
        _rescale_kernel,
        out_shape=jax.ShapeDtypeStruct((N, C, S), x_flat.dtype),
        grid_spec=pltpu.PrefetchScalarGridSpec(
            num_scalar_prefetch=0,
            grid=(N, ns),
            in_specs=[pl.BlockSpec((1, C, ts), lambda n, s: (n, 0, s)),
                      pl.BlockSpec((1, C, 1), lambda n, s: (n, 0, 0))],
            out_specs=pl.BlockSpec((1, C, ts), lambda n, s: (n, 0, s)),
        ),
        compiler_params=pltpu.CompilerParams(
            dimension_semantics=("parallel", "parallel"),
            vmem_limit_bytes=int(vmem_limit)),
        cost_estimate=pl.CostEstimate(
            flops=int(N * C * S), transcendentals=0,
            bytes_accessed=int(2 * N * C * S * itemsize + N * C * 4)),
    )(x_flat, scale)


# --------------------------------------------------------------------------
# Wrapper / dispatch.
# --------------------------------------------------------------------------
def _pack_se_params(w1, b1, w2, b2):
    """Pack w1 (Cr,C), b1 (Cr,), w2 (C,Cr), b2 (C,) into one (C+1, Cr+C) f32."""
    Cr, C = w1.shape
    P = jnp.zeros((C + 1, Cr + C), dtype=jnp.float32)
    P = P.at[:C, :Cr].set(w1.astype(jnp.float32).T)
    P = P.at[C, :Cr].set(b1.astype(jnp.float32))
    P = P.at[:Cr, Cr:].set(w2.astype(jnp.float32).T)
    P = P.at[Cr, Cr:].set(b2.astype(jnp.float32))
    return P


def _pick_ts(S, C, itemsize, budget):
    """Lane-aligned spatial tile whose double-buffered in+out fits `budget`."""
    t = budget // (4 * C * itemsize)
    t = (t // 128) * 128
    t = max(t, 128)
    return int(min(t, S))


def ca_layer(x, w1, b1, w2, b2, *, vmem_budget_bytes=40 << 20):
    """CALayer forward.  x: (N, C, D, H, W); w1: (Cr, C); b1: (Cr,);
    w2: (C, Cr); b2: (C,).  Supports float32 or bfloat16 x (math in f32).

    vmem_budget_bytes: working-set budget for the fused single-pass path
    (default 40 MiB, safe under v7x's 64 MiB physical VMEM; on v5e/v6e with
    128 MiB VMEM it can be raised to keep the fused path at larger sizes).
    """
    N, C, D, H, W = x.shape
    S = D * H * W
    itemsize = jnp.dtype(x.dtype).itemsize
    x_flat = x.reshape(N, C, S)

    # double-buffered input + output per sample
    per_sample = 4 * C * S * itemsize

    if per_sample <= vmem_budget_bytes:
        # Fused single pass: largest batch chunk (divisor of N) within budget.
        nb = max(1, min(N, vmem_budget_bytes // per_sample))
        while N % nb:
            nb -= 1
        nb = int(nb)
        vmem_limit = min(max(nb * per_sample + (8 << 20), 32 << 20), 56 << 20)
        packed = _pack_se_params(w1, b1, w2, b2)
        out = _ca_fused(x_flat, packed, nb=nb, vmem_limit=vmem_limit)
    else:
        # S-tiled two-pass fallback (pool -> tiny JAX MLP -> rescale).
        ts = _pick_ts(S, C, itemsize, min(vmem_budget_bytes, 16 << 20))
        out = _ca_tiled(x_flat, w1, b1, w2, b2, ts=ts, vmem_limit=32 << 20)

    return out.reshape(N, C, D, H, W)


def ca_layer_ref(x, w1, b1, w2, b2):
    """Pure-JAX reference matching the PyTorch semantics (f32 math)."""
    xf = x.astype(jnp.float32)
    y = jnp.mean(xf, axis=(2, 3, 4))                       # (N, C)
    h = jnp.maximum(y @ w1.T + b1, 0.0)                    # (N, Cr)
    z = jax.nn.sigmoid(h @ w2.T + b2)                      # (N, C)
    return xf * z[:, :, None, None, None]


if __name__ == "__main__":
    key = jax.random.PRNGKey(0)
    k_x, k_w1, k_b1, k_w2, k_b2, k_x2 = jax.random.split(key, 6)

    N, C, D, H, W = 2, 32, 4, 8, 8        # S = 256
    reduction = 16
    Cr = C // reduction                   # 2

    x = jax.random.normal(k_x, (N, C, D, H, W), dtype=jnp.float32)
    # Deterministic synthetic params (kaiming-style fan-in scale * 0.1, as in
    # tools.initialize_weights with scale=0.1); 1x1x1 conv kernels as matrices.
    w1 = jax.random.normal(k_w1, (Cr, C), dtype=jnp.float32) * (0.1 * (2.0 / C) ** 0.5)
    b1 = jax.random.normal(k_b1, (Cr,), dtype=jnp.float32) * 0.01
    w2 = jax.random.normal(k_w2, (C, Cr), dtype=jnp.float32) * (0.1 * (1.0 / Cr) ** 0.5)
    b2 = jax.random.normal(k_b2, (C,), dtype=jnp.float32) * 0.01

    ref = ca_layer_ref(x, w1, b1, w2, b2)

    # 1) Fused single-pass path (whole batch in one grid step).
    out = jax.block_until_ready(ca_layer(x, w1, b1, w2, b2))
    assert out.shape == x.shape
    assert jnp.allclose(out, ref, atol=1e-5, rtol=1e-5), "fused f32 mismatch"

    # 2) S-tiled two-pass fallback (forced via a tiny VMEM budget).
    out_t = jax.block_until_ready(
        ca_layer(x, w1, b1, w2, b2, vmem_budget_bytes=64 * 1024))
    assert jnp.allclose(out_t, ref, atol=1e-5, rtol=1e-5), "tiled f32 mismatch"

    # 3) Ragged spatial extent (S=192 not a multiple of the 128-lane tile).
    x3 = jax.random.normal(k_x2, (N, C, 3, 8, 8), dtype=jnp.float32)
    ref3 = ca_layer_ref(x3, w1, b1, w2, b2)
    out3 = jax.block_until_ready(
        ca_layer(x3, w1, b1, w2, b2, vmem_budget_bytes=64 * 1024))
    assert jnp.allclose(out3, ref3, atol=1e-5, rtol=1e-5), "ragged tiled mismatch"

    # 4) bf16 I/O path (pool / MLP / sigmoid stay in f32 inside the kernel).
    out_bf = jax.block_until_ready(
        ca_layer(x.astype(jnp.bfloat16), w1, b1, w2, b2))
    assert out_bf.dtype == jnp.bfloat16
    assert jnp.allclose(out_bf.astype(jnp.float32), ref, atol=5e-2, rtol=5e-2), \
        "fused bf16 mismatch"

    print("KERNEL_OK")
</pallas_src>

<mosaic_0001>
module attributes {stable_mosaic.version = 11 : i64} {
  func.func @_ca_fused_kernel(%arg0: i32, %arg1: memref<2x32x256xf32, #tpu.memory_space<vmem>>, %arg2: memref<33x34xf32, #tpu.memory_space<vmem>>, %arg3: memref<2x32x256xf32, #tpu.memory_space<vmem>>) attributes {dimension_semantics = [#tpu.dimension_semantics<parallel>], iteration_bounds = array<i64: 1>, scalar_prefetch = 0 : i64, scratch_operands = 0 : i64, tpu.core_type = #tpu.core_type<tc>, window_params = [{transform_indices = @transform_0, window_bounds = array<i64: 2, 32, 256>}, {pipeline_mode = #tpu.pipeline_mode<synchronous>, transform_indices = @transform_1, window_bounds = array<i64: 33, 34>}, {transform_indices = @transform_2, window_bounds = array<i64: 2, 32, 256>}]} {
    %c0 = arith.constant 0 : index
    %c0_0 = arith.constant 0 : index
    %c0_1 = arith.constant 0 : index
    %0 = vector.load %arg1[%c0, %c0_0, %c0_1] : memref<2x32x256xf32, #tpu.memory_space<vmem>>, vector<2x32x256xf32>
    %cst = arith.constant dense<0.000000e+00> : vector<2x32xf32>
    %1 = vector.multi_reduction <add>, %0, %cst [2] : vector<2x32x256xf32> to vector<2x32xf32>
    %cst_2 = arith.constant 2.560000e+02 : f32
    %2 = vector.broadcast %cst_2 : f32 to vector<2x32xf32>
    %3 = arith.divf %1, %2 : vector<2x32xf32>
    %c0_3 = arith.constant 0 : index
    %c0_4 = arith.constant 0 : index
    %4 = vector.load %arg2[%c0_3, %c0_4] : memref<33x34xf32, #tpu.memory_space<vmem>>, vector<33x34xf32>
    %5 = vector.extract_strided_slice %4 {offsets = [0, 0], sizes = [32, 2], strides = [1, 1]} : vector<33x34xf32> to vector<32x2xf32>
    %6 = vector.extract_strided_slice %4 {offsets = [32, 0], sizes = [1, 2], strides = [1, 1]} : vector<33x34xf32> to vector<1x2xf32>
    %7 = vector.extract_strided_slice %4 {offsets = [0, 2], sizes = [2, 32], strides = [1, 1]} : vector<33x34xf32> to vector<2x32xf32>
    %8 = vector.extract_strided_slice %4 {offsets = [2, 2], sizes = [1, 32], strides = [1, 1]} : vector<33x34xf32> to vector<1x32xf32>
    %cst_5 = arith.constant dense<0.000000e+00> : vector<2x2xf32>
    %9 = tpu.matmul %3, %5, %cst_5 {dimension_numbers = #tpu.dot_dimension_numbers<[1], [0], [0], [1], [0, 0, 1, 1], [], []>} : vector<2x32xf32>, vector<32x2xf32>, vector<2x2xf32> -> vector<2x2xf32>
    %10 = vector.broadcast %6 : vector<1x2xf32> to vector<2x2xf32>
    %11 = arith.addf %9, %10 : vector<2x2xf32>
    %cst_6 = arith.constant 0.000000e+00 : f32
    %12 = vector.broadcast %cst_6 : f32 to vector<2x2xf32>
    %13 = arith.maximumf %11, %12 : vector<2x2xf32>
    %cst_7 = arith.constant dense<0.000000e+00> : vector<2x32xf32>
    %14 = tpu.matmul %13, %7, %cst_7 {dimension_numbers = #tpu.dot_dimension_numbers<[1], [0], [0], [1], [0, 0, 1, 1], [], []>} : vector<2x2xf32>, vector<2x32xf32>, vector<2x32xf32> -> vector<2x32xf32>
    %15 = vector.broadcast %8 : vector<1x32xf32> to vector<2x32xf32>
    %16 = arith.addf %14, %15 : vector<2x32xf32>
    %17 = arith.negf %16 : vector<2x32xf32>
    %18 = math.exp %17 : vector<2x32xf32>
    %cst_8 = arith.constant 1.000000e+00 : f32
    %19 = vector.broadcast %cst_8 : f32 to vector<2x32xf32>
    %20 = arith.addf %19, %18 : vector<2x32xf32>
    %21 = arith.divf %19, %20 : vector<2x32xf32>
    %22 = vector.shape_cast %21 : vector<2x32xf32> to vector<2x32x1xf32>
    %23 = vector.broadcast %22 : vector<2x32x1xf32> to vector<2x32x256xf32>
    %24 = arith.mulf %0, %23 : vector<2x32x256xf32>
    %c0_9 = arith.constant 0 : index
    %c0_10 = arith.constant 0 : index
    %c0_11 = arith.constant 0 : index
    %25 = vector.load %arg3[%c0_9, %c0_10, %c0_11] : memref<2x32x256xf32, #tpu.memory_space<vmem>>, vector<2x32x256xf32>
    tpu.vector_store %arg3[%c0_9, %c0_10, %c0_11], %24 {strides = array<i32>} : memref<2x32x256xf32, #tpu.memory_space<vmem>>, vector<2x32x256xf32>,
    return
  }
  func.func @transform_0(%arg0: i32) -> (i32, i32, i32) {
    %c0_i32 = arith.constant 0 : i32
    %c0_i32_0 = arith.constant 0 : i32
    %c0_i32_1 = arith.constant 0 : i32
    return %arg0, %c0_i32, %c0_i32_0 : i32, i32, i32
  }
  func.func @transform_1(%arg0: i32) -> (i32, i32) {
    %c0_i32 = arith.constant 0 : i32
    %c0_i32_0 = arith.constant 0 : i32
    %c0_i32_1 = arith.constant 0 : i32
    return %c0_i32, %c0_i32_0 : i32, i32
  }
  func.func @transform_2(%arg0: i32) -> (i32, i32, i32) {
    %c0_i32 = arith.constant 0 : i32
    %c0_i32_0 = arith.constant 0 : i32
    %c0_i32_1 = arith.constant 0 : i32
    return %arg0, %c0_i32, %c0_i32_0 : i32, i32, i32
  }
}

</mosaic_0001>

<llo_original>
// kernel: tpu_custom_call.1
$region0: #{tpu_custom_call.1}
  #allocation0 [shape = 'u32[]', space=smem, size = 0x4, offset = 0x4, fixed_abs, tag = 'smem constant byte address 0x4 - core index']
  #allocation1 [shape = 'u32[72,128]{1,0:T(1,128)}', space=vmem, size = 0x9000, scoped, tag = 'internal scratch']
  %s0 = inlined_call_operand.hbm [shape: f32[2,32,256], index: 0, kind: input, shape index: {}]
  %s1 = inlined_call_operand.hbm [shape: f32[33,34], index: 1, kind: input, shape index: {}]
  %s2 = inlined_call_operand.hbm [shape: f32[2,32,256], index: 2, kind: output, shape index: {}]
  %s3 = sld [smem:[#allocation0]]
  $region26: #{tpu_custom_call.1} parent=0
    _
  %s5 = ssub.s32 1, %s3
  %s6 = scalar_select 0, %s5, %s3
  $region1: #{tpu_custom_call.1} parent=0
    #allocation2 [shape = 'u8[65536]{0}', space=vmem, size = 0x10000, scoped, tag = 'input window, operand 0, single buffered']
    #allocation3 [shape = 's32[1]{0}', space=sflag, size = 0x4, scoped, tag = 'scoped memory for tpu_custom_call.1']
    #allocation4 [shape = 's32[1]{0}', space=sflag, size = 0x4, scoped, tag = 'scoped memory for tpu_custom_call.1']
    #allocation5 [shape = 'u8[20480]{0}', space=vmem, size = 0x5000, scoped, tag = 'input window, operand 1, single buffered']
    #allocation6 [shape = 's32[1]{0}', space=sflag, size = 0x4, scoped, tag = 'scoped memory for tpu_custom_call.1']
    #allocation7 [shape = 'u8[65536]{0}', space=vmem, size = 0x10000, scoped, tag = 'output window, operand 0, single buffered']
    %7 = vsyncpa [#allocation3], 0
    %8 = vsyncpa [#allocation6], 0
    %9 = vsyncpa [#allocation4], 0
    // Predicated region
    $region2: #{tpu_custom_call.1} parent=1 // pred_check
      _
    $region3: #{tpu_custom_call.1} parent=1 // pred_check_branch
      %11 = sbr.rel (0) target = $region5
    $region4: #{tpu_custom_call.1} parent=1 // pred_region
      %13 = vsyncadd [#allocation3], 0
      %s14 = sshll.u32 %s0, 4
      %s15 = int_to_ptr.hbm [resolvable:$true] %s14
      %s16 = sshll.u32 [#allocation2], 4
      %s17 = int_to_ptr.vmem [resolvable:$true] %s16
      %22 = dma.hbm_to_vmem [thread:$0]  %s15, 2048, %s17, [#allocation3], 256, 256, 16
    $region5: #{tpu_custom_call.1} parent=1 // pred_fallthru
      _
    // Predicated region
    $region6: #{tpu_custom_call.1} parent=1 // pred_check
      _
    $region7: #{tpu_custom_call.1} parent=1 // pred_check_branch
      %24 = sbr.rel (0) target = $region9
    $region8: #{tpu_custom_call.1} parent=1 // pred_region
      %26 = vsyncadd [#allocation6], 0
      %s27 = sshll.u32 %s1, 4
      %s28 = int_to_ptr.hbm [resolvable:$true] %s27
      %s29 = sshll.u32 [#allocation5], 4
      %s30 = int_to_ptr.vmem [resolvable:$true] %s29
      %35 = dma.hbm_to_vmem [thread:$0]  %s28, 640, %s30, [#allocation6], 128, 128, 8
    $region9: #{tpu_custom_call.1} parent=1 // pred_fallthru
      _
    // Predicated region
    $region10: #{tpu_custom_call.1} parent=1 // pred_check
      _
    $region11: #{tpu_custom_call.1} parent=1 // pred_check_branch
      %37 = sbr.rel (0) target = $region13
    $region12: #{tpu_custom_call.1} parent=1 // pred_region
      %39 = dma.done [#allocation3], 2048
    $region13: #{tpu_custom_call.1} parent=1 // pred_fallthru
      _
    // Predicated region
    $region14: #{tpu_custom_call.1} parent=1 // pred_check
      _
    $region15: #{tpu_custom_call.1} parent=1 // pred_check_branch
      %41 = sbr.rel (0) target = $region17
    $region16: #{tpu_custom_call.1} parent=1 // pred_region
      %43 = dma.done [#allocation6], 640
    $region17: #{tpu_custom_call.1} parent=1 // pred_fallthru
      _
    %v44 = vld [vmem:[#allocation2] sm:$0xff]
    %v45 = vld [vmem:[#allocation2 + $0x8] sm:$0xff]
    %v46 = vld [vmem:[#allocation2 + $0x10] sm:$0xff]
    %v47 = vld [vmem:[#allocation2 + $0x18] sm:$0xff]
    %v48 = vld [vmem:[#allocation2 + $0x20] sm:$0xff]
    %v49 = vld [vmem:[#allocation2 + $0x28] sm:$0xff]
    %v50 = vld [vmem:[#allocation2 + $0x30] sm:$0xff]
    %v51 = vld [vmem:[#allocation2 + $0x38] sm:$0xff]
    %v52 = vld [vmem:[#allocation2 + $0x40] sm:$0xff]
    %v53 = vld [vmem:[#allocation2 + $0x48] sm:$0xff]
    %v54 = vld [vmem:[#allocation2 + $0x50] sm:$0xff]
    %v55 = vld [vmem:[#allocation2 + $0x58] sm:$0xff]
    %v56 = vld [vmem:[#allocation2 + $0x60] sm:$0xff]
    %v57 = vld [vmem:[#allocation2 + $0x68] sm:$0xff]
    %v58 = vld [vmem:[#allocation2 + $0x70] sm:$0xff]
    %v59 = vld [vmem:[#allocation2 + $0x78] sm:$0xff]
    %v60 = vadd.f32 %v44, %v45
    %61 = vadd.xlane.f32.xlu0 %v60
    %v62 = vpop.xlane.xlu0 %61
    %v63 = vadd.f32 %v46, %v47
    %64 = vadd.xlane.f32.xlu0 %v63
    %v65 = vpop.xlane.xlu0 %64
    %v66 = vadd.f32 %v48, %v49
    %67 = vadd.xlane.f32.xlu0 %v66
    %v68 = vpop.xlane.xlu0 %67
    %v69 = vadd.f32 %v50, %v51
    %70 = vadd.xlane.f32.xlu0 %v69
    %v71 = vpop.xlane.xlu0 %70
    %v72 = vadd.f32 %v52, %v53
    %73 = vadd.xlane.f32.xlu0 %v72
    %v74 = vpop.xlane.xlu0 %73
    %v75 = vadd.f32 %v54, %v55
    %76 = vadd.xlane.f32.xlu0 %v75
    %v77 = vpop.xlane.xlu0 %76
    %v78 = vadd.f32 %v56, %v57
    %79 = vadd.xlane.f32.xlu0 %v78
    %v80 = vpop.xlane.xlu0 %79
    %v81 = vadd.f32 %v58, %v59
    %82 = vadd.xlane.f32.xlu0 %v81
    %v83 = vpop.xlane.xlu0 %82
    %v84 = vrcp.pop 256.0
    %v85 = vmul.f32 256.0, %v84
    %v86 = vsub.f32 1.0, %v85
    %v87 = vmul.f32 %v84, %v86
    %v88 = vadd.f32 %v84, %v87
    %vm89 = vweird.f32 %v84
    %v90 = vsel %vm89, %v84, %v88
    %v91 = vmul.f32 %v62, %v90
    %v92 = vmul.f32 %v65, %v90
    %v93 = vmul.f32 %v68, %v90
    %v94 = vmul.f32 %v71, %v90
    %v95 = vmul.f32 %v74, %v90
    %v96 = vmul.f32 %v77, %v90
    %v97 = vmul.f32 %v80, %v90
    %v98 = vmul.f32 %v83, %v90
    %v99 = vld [vmem:[#allocation5] sm:$0xff]
    %v100 = vld [vmem:[#allocation5 + $0x8] sm:$0xff]
    %v101 = vld [vmem:[#allocation5 + $0x10] sm:$0xff]
    %v102 = vld [vmem:[#allocation5 + $0x18] sm:$0xff]
    %v103 = vld [vmem:[#allocation5 + $0x20] sm:$0x1]
    %v104 = vperm.slane %v103, 0
    %v113 = vlaneseq
    %v114 = vand.u32 %v113, 127
    %v115 = vperm.slane %v91, %v114
    %v116 = vadd.s32 %v114, 4294967288
    %v117 = vperm.slane %v92, %v116
    %vm118 = vcmask 130112
    %v119 = vsel %vm118, %v117, %v115
    %v120 = vadd.s32 %v114, 4294967280
    %v121 = vperm.slane %v93, %v120
    %vm122 = vcmask 195712
    %v123 = vsel %vm122, %v121, %v119
    %v124 = vadd.s32 %v114, 4294967272
    %v125 = vperm.slane %v94, %v124
    %vm126 = vcmask 261312
    %v127 = vsel %vm126, %v125, %v123
    %v128 = vperm.slane %v95, %v114
    %v129 = vperm.slane %v96, %v116
    %v130 = vsel %vm118, %v129, %v128
    %v131 = vperm.slane %v97, %v120
    %v132 = vsel %vm122, %v131, %v130
    %v133 = vperm.slane %v98, %v124
    %v134 = vsel %vm126, %v133, %v132
    %vm135 = vcmask 1041409
    %v136 = vsel %vm135, %v134, %v127
    %vm137 = vcmask 261120
    %v138 = vsel %vm137, %v136, 0
    %140 = vmatpush.msra.mxu0 0.0
    %141 = vmatpush.msra.mxu0 0.0
    %142 = vmatpush.msra.mxu0 0.0
    %143 = vmatpush.msra.mxu0 0.0
    %144 = vmatpush.msra.mxu0 0.0
    %145 = vmatpush.msra.mxu0 0.0
    %146 = vmatpush.msra.mxu0 0.0
    %147 = vmatpush.msra.mxu0 0.0
    %148 = vmatpush.msra.mxu0 0.0
    %149 = vmatpush.msra.mxu0 0.0
    %150 = vmatpush.msra.mxu0 0.0
    %151 = vmatpush.msra.mxu0 0.0
    %152 = vmatpush.msra.mxu0 %v102
    %153 = vmatpush.msra.mxu0 %v101
    %154 = vmatpush.msra.mxu0 %v100
    %155 = vmatpush.msra.mxu0 %v99
    %156 = vmatmul.f32.gmra.mxu0 %v138
    %v157 = vpop.f32.mrf.mxu0
    %v158 = vadd.f32 %v104, %v157
    %159 = vdwg.mxu0
    %v160 = vmax.f32 %v158, 0.0
    %v161 = vperm.slane %v99, 2
    %163 = vrot.lane.b32.xlu0 %v99, 126
    %v164 = vpop.permute.xlu0 %163
    %166 = vrot.lane.b32.xlu0 %v161, 126
    %v167 = vpop.permute.xlu0 %166
    %vm169 = vcmask 15360
    %v171 = vsel %vm169, %v160, 0
    %vm173 = vcmask 1041408
    %v174 = vsel %vm173, %v164, 0
    %176 = vmatpush.msra.mxu0 0.0
    %177 = vmatpush.msra.mxu0 0.0
    %178 = vmatpush.msra.mxu0 0.0
    %179 = vmatpush.msra.mxu0 0.0
    %180 = vmatpush.msra.mxu0 0.0
    %181 = vmatpush.msra.mxu0 0.0
    %182 = vmatpush.msra.mxu0 0.0
    %183 = vmatpush.msra.mxu0 0.0
    %184 = vmatpush.msra.mxu0 0.0
    %185 = vmatpush.msra.mxu0 0.0
    %186 = vmatpush.msra.mxu0 0.0
    %187 = vmatpush.msra.mxu0 0.0
    %188 = vmatpush.msra.mxu0 0.0
    %189 = vmatpush.msra.mxu0 0.0
    %190 = vmatpush.msra.mxu0 0.0
    %191 = vmatpush.msra.mxu0 %v174
    %192 = vmatmul.f32.gmra.mxu0 %v171
    %v193 = vpop.f32.mrf.mxu0
    %v194 = vadd.f32 %v167, %v193
    %195 = vdwg.mxu0
    %v196 = vxor.u32 %v194, 2147483648
    %v197 = vmul.f32 %v196, 1.442695
    %v198 = vpow.pop %v197
    %v199 = vadd.f32 %v198, 1.0
    %v200 = vrcp.pop %v199
    %v201 = vmul.f32 %v199, %v200
    %v202 = vsub.f32 1.0, %v201
    %v203 = vmul.f32 %v200, %v202
    %v204 = vadd.f32 %v200, %v203
    %vm205 = vweird.f32 %v199
    %vm206 = vweird.f32 %v200
    %vm207 = vmor %vm205, %vm206
    %v208 = vsel %vm207, %v200, %v204
    %v209 = vand.u32 2147483647, %v199
    %vm210 = vcmp.eq.f32.partialorder %v209, 8.507059e+37
    %v211 = vand.u32 %v199, 2147483648
    %v212 = vor.u32 1.1754944e-38, %v211
    %v213 = vsel %vm210, %v212, %v208
    %v214 = vmul.f32 1.0, %v213
    %v215 = vperm.slane %v214, 0
    %v216 = vlaneseq
    %v217 = vshrl.u32 %v216, 7
    %219 = vset.pattern.permute.xlu0 %v217
    %220 = vperm.xlu0 %219, %v215
    %v221 = vpop.permute.xlu0 %220
    %v222 = vlaneseq
    %v223 = vshrl.u32 %v222, 7
    %v224 = vadd.s32 %v223, 8
    %225 = vset.pattern.permute.xlu0 %v224
    %226 = vperm.xlu0 %225, %v215
    %v227 = vpop.permute.xlu0 %226
    %v228 = vlaneseq
    %v229 = vshrl.u32 %v228, 7
    %v230 = vadd.s32 %v229, 16
    %231 = vset.pattern.permute.xlu0 %v230
    %232 = vperm.xlu0 %231, %v215
    %v233 = vpop.permute.xlu0 %232
    %v234 = vlaneseq
    %v235 = vshrl.u32 %v234, 7
    %v236 = vadd.s32 %v235, 24
    %237 = vset.pattern.permute.xlu0 %v236
    %238 = vperm.xlu0 %237, %v215
    %v239 = vpop.permute.xlu0 %238
    %v240 = vperm.slane %v214, 1
    %v241 = vlaneseq
    %v242 = vshrl.u32 %v241, 7
    %244 = vset.pattern.permute.xlu0 %v242
    %245 = vperm.xlu0 %244, %v240
    %v246 = vpop.permute.xlu0 %245
    %v247 = vlaneseq
    %v248 = vshrl.u32 %v247, 7
    %v249 = vadd.s32 %v248, 8
    %250 = vset.pattern.permute.xlu0 %v249
    %251 = vperm.xlu0 %250, %v240
    %v252 = vpop.permute.xlu0 %251
    %v253 = vlaneseq
    %v254 = vshrl.u32 %v253, 7
    %v255 = vadd.s32 %v254, 16
    %256 = vset.pattern.permute.xlu0 %v255
    %257 = vperm.xlu0 %256, %v240
    %v258 = vpop.permute.xlu0 %257
    %v259 = vlaneseq
    %v260 = vshrl.u32 %v259, 7
    %v261 = vadd.s32 %v260, 24
    %262 = vset.pattern.permute.xlu0 %v261
    %263 = vperm.xlu0 %262, %v240
    %v264 = vpop.permute.xlu0 %263
    %v265 = vmul.f32 %v44, %v221
    %v266 = vmul.f32 %v45, %v221
    %v267 = vmul.f32 %v46, %v227
    %v268 = vmul.f32 %v47, %v227
    %v269 = vmul.f32 %v48, %v233
    %v270 = vmul.f32 %v49, %v233
    %v271 = vmul.f32 %v50, %v239
    %v272 = vmul.f32 %v51, %v239
    %v273 = vmul.f32 %v52, %v246
    %v274 = vmul.f32 %v53, %v246
    %v275 = vmul.f32 %v54, %v252
    %v276 = vmul.f32 %v55, %v252
    %v277 = vmul.f32 %v56, %v258
    %v278 = vmul.f32 %v57, %v258
    %v279 = vmul.f32 %v58, %v264
    %v280 = vmul.f32 %v59, %v264
    %281 = vst [vmem:[#allocation7] sm:$0xff] %v265
    %282 = vst [vmem:[#allocation7 + $0x8] sm:$0xff] %v266
    %283 = vst [vmem:[#allocation7 + $0x10] sm:$0xff] %v267
    %284 = vst [vmem:[#allocation7 + $0x18] sm:$0xff] %v268
    %285 = vst [vmem:[#allocation7 + $0x20] sm:$0xff] %v269
    %286 = vst [vmem:[#allocation7 + $0x28] sm:$0xff] %v270
    %287 = vst [vmem:[#allocation7 + $0x30] sm:$0xff] %v271
    %288 = vst [vmem:[#allocation7 + $0x38] sm:$0xff] %v272
    %289 = vst [vmem:[#allocation7 + $0x40] sm:$0xff] %v273
    %290 = vst [vmem:[#allocation7 + $0x48] sm:$0xff] %v274
    %291 = vst [vmem:[#allocation7 + $0x50] sm:$0xff] %v275
    %292 = vst [vmem:[#allocation7 + $0x58] sm:$0xff] %v276
    %293 = vst [vmem:[#allocation7 + $0x60] sm:$0xff] %v277
    %294 = vst [vmem:[#allocation7 + $0x68] sm:$0xff] %v278
    %295 = vst [vmem:[#allocation7 + $0x70] sm:$0xff] %v279
    %296 = vst [vmem:[#allocation7 + $0x78] sm:$0xff] %v280
    // Predicated region
    $region18: #{tpu_custom_call.1} parent=1 // pred_check
      _
    $region19: #{tpu_custom_call.1} parent=1 // pred_check_branch
      %298 = sbr.rel (0) target = $region21
    $region20: #{tpu_custom_call.1} parent=1 // pred_region
      %300 = vsyncadd [#allocation4], 0
      %s301 = sshll.u32 [#allocation7], 4
      %s302 = int_to_ptr.vmem [resolvable:$true] %s301
      %s303 = sshll.u32 %s2, 4
      %s304 = int_to_ptr.hbm [resolvable:$true] %s303
      %309 = dma.vmem_to_hbm [thread:$0]  %s302, 2048, %s304, [#allocation4], 256, 256, 16
    $region21: #{tpu_custom_call.1} parent=1 // pred_fallthru
      _
    // Predicated region
    $region22: #{tpu_custom_call.1} parent=1 // pred_check
      _
    $region23: #{tpu_custom_call.1} parent=1 // pred_check_branch
      %311 = sbr.rel (0) target = $region25
    $region24: #{tpu_custom_call.1} parent=1 // pred_region
      %313 = dma.done [#allocation4], 2048
    $region25: #{tpu_custom_call.1} parent=1 // pred_fallthru
      _
    %314 = vsyncpa [#allocation3], 1
    %315 = vsyncpa [#allocation6], 1
    %316 = vsyncpa [#allocation4], 1

</llo_original>
